<compile_context>
chip_gen: v7x
topology: tpu7x:2x2x1
jax: 0.10.0
libtpu: 0.0.40
codegen_flags: <defaults>
</compile_context>

<pallas_src>
import jax
import jax.numpy as jnp
from jax.experimental import pallas as pl
from jax.experimental.pallas import tpu as pltpu


_LANES = 512                    # lane-dense last dim (multiple of 128)
_MAX_TM = 1024                  # row tile cap: 1024 x 512 f32 = 2 MiB / buffer
_FAST_PATH_BYTES = 256 * 1024   # below this, skip pallas and let XLA fuse


def _add_kernel(a_ref, b_ref, o_ref):
    # Elementwise residual add on the VPU.
    o_ref[...] = a_ref[...] + b_ref[...]


def _round_up(v: int, m: int) -> int:
    return ((v + m - 1) // m) * m


@jax.jit
def _shortcut_pallas(a: jax.Array, b: jax.Array) -> jax.Array:
    """Tiled, lane-dense Pallas add: returns a + b with a/b of identical shape."""
    shape = a.shape
    total = a.size
    dtype = a.dtype

    # Lane-dense flatten: pad the flat length so it forms whole (tm, 512) tiles.
    rows = _round_up(total, _LANES) // _LANES
    tm = min(_MAX_TM, _round_up(rows, 8))      # row tile, multiple of 8
    rows_pad = _round_up(rows, tm)             # every grid block is full
    padded_total = rows_pad * _LANES
    pad = padded_total - total

    def _flat(v):
        v = v.reshape(-1)
        if pad:
            v = jnp.pad(v, (0, pad))
        return v.reshape(rows_pad, _LANES)

    a2 = _flat(a)
    b2 = _flat(b)

    grid = (rows_pad // tm,)

    out2 = pl.pallas_call(
        _add_kernel,
        out_shape=jax.ShapeDtypeStruct((rows_pad, _LANES), dtype),
        grid=grid,
        in_specs=[
            pl.BlockSpec((tm, _LANES), lambda i: (i, 0)),
            pl.BlockSpec((tm, _LANES), lambda i: (i, 0)),
        ],
        out_specs=pl.BlockSpec((tm, _LANES), lambda i: (i, 0)),
        # Residual add: write the result into x's (padded/flattened) buffer.
        input_output_aliases={1: 0},
        compiler_params=pltpu.CompilerParams(
            dimension_semantics=("parallel",),       # shard steps over TCs (v7x)
            vmem_limit_bytes=32 * 1024 * 1024,       # headroom, fits v7x's 64 MiB
        ),
    )(a2, b2)

    out = out2.reshape(-1)
    if pad:
        out = out[:total]
    return out.reshape(shape)


def shortcut_add(shortcut_out: jax.Array, x: jax.Array, *, force_pallas: bool = False) -> jax.Array:
    """Pallas equivalent of Shortcut.forward: shortcut_out + x."""
    assert shortcut_out.shape == x.shape, "shortcut branch must match x shape"
    assert shortcut_out.dtype == x.dtype, "shortcut branch must match x dtype"

    nbytes = x.size * jnp.dtype(x.dtype).itemsize
    if not force_pallas and nbytes < _FAST_PATH_BYTES:
        # Tiny add: kernel launch overhead dominates; let XLA fuse it.
        return shortcut_out + x
    return _shortcut_pallas(shortcut_out, x)


class Shortcut:
    """JAX/Pallas mirror of the PyTorch Shortcut module."""

    def __init__(self, lay_num: int):
        self.shortcut_layer_num = lay_num
        self.layer_outputs_arr = None  # assign a list of jax arrays before forward

    def __call__(self, x: jax.Array) -> jax.Array:
        if self.layer_outputs_arr is None:
            raise Exception(
                "shortcut_layer_output is None. You should assign layers outputs "
                "array to prop of Shorcat class instance: outputs_arr"
            )
        return shortcut_add(self.layer_outputs_arr[self.shortcut_layer_num], x)


if __name__ == "__main__":
    key = jax.random.PRNGKey(0)
    k1, k2, k3, k4 = jax.random.split(key, 4)

    # --- Test 1: module at the spec shape (tiny -> fast path) --------------
    x_small = jax.random.normal(k1, (2, 4, 16, 16), dtype=jnp.float32)
    prev_small = jax.random.normal(k2, (2, 4, 16, 16), dtype=jnp.float32)

    module = Shortcut(lay_num=0)
    module.layer_outputs_arr = [prev_small]

    out_small = jax.block_until_ready(module(x_small))
    ref_small = prev_small + x_small
    assert out_small.shape == x_small.shape and out_small.dtype == x_small.dtype
    assert jnp.allclose(out_small, ref_small, atol=1e-6), "mismatch (fast path)"

    # --- Test 2: force the Pallas kernel on the spec shape (pad + 1 block) --
    out_forced = jax.block_until_ready(
        shortcut_add(prev_small, x_small, force_pallas=True)
    )
    assert jnp.allclose(out_forced, ref_small, atol=1e-6), "mismatch (pallas, tiny)"

    # --- Test 3: larger activation -> natural Pallas path, grid > 1 --------
    x_big = jax.random.normal(k3, (8, 32, 64, 64), dtype=jnp.float32)
    prev_big = jax.random.normal(k4, (8, 32, 64, 64), dtype=jnp.float32)
    out_big = jax.block_until_ready(shortcut_add(prev_big, x_big))
    ref_big = prev_big + x_big
    assert out_big.shape == x_big.shape and out_big.dtype == x_big.dtype
    assert jnp.allclose(out_big, ref_big, atol=1e-6), "mismatch (pallas, tiled)"

    print("KERNEL_OK")
</pallas_src>

<mosaic_0001>
module attributes {stable_mosaic.version = 11 : i64} {
  func.func @_add_kernel(%arg0: i32, %arg1: memref<8x512xf32, #tpu.memory_space<vmem>>, %arg2: memref<8x512xf32, #tpu.memory_space<vmem>>, %arg3: memref<8x512xf32, #tpu.memory_space<vmem>>) attributes {dimension_semantics = [#tpu.dimension_semantics<parallel>], iteration_bounds = array<i64: 1>, scalar_prefetch = 0 : i64, scratch_operands = 0 : i64, tpu.core_type = #tpu.core_type<tc>, window_params = [{transform_indices = @transform_0, window_bounds = array<i64: 8, 512>}, {transform_indices = @transform_1, window_bounds = array<i64: 8, 512>}, {transform_indices = @transform_2, window_bounds = array<i64: 8, 512>}]} {
    %c0 = arith.constant 0 : index
    %c0_0 = arith.constant 0 : index
    %0 = vector.load %arg1[%c0, %c0_0] : memref<8x512xf32, #tpu.memory_space<vmem>>, vector<8x512xf32>
    %c0_1 = arith.constant 0 : index
    %c0_2 = arith.constant 0 : index
    %1 = vector.load %arg2[%c0_1, %c0_2] : memref<8x512xf32, #tpu.memory_space<vmem>>, vector<8x512xf32>
    %2 = arith.addf %0, %1 : vector<8x512xf32>
    %c0_3 = arith.constant 0 : index
    %c0_4 = arith.constant 0 : index
    %3 = vector.load %arg3[%c0_3, %c0_4] : memref<8x512xf32, #tpu.memory_space<vmem>>, vector<8x512xf32>
    tpu.vector_store %arg3[%c0_3, %c0_4], %2 {strides = array<i32>} : memref<8x512xf32, #tpu.memory_space<vmem>>, vector<8x512xf32>,
    return
  }
  func.func @transform_0(%arg0: i32) -> (i32, i32) {
    %c0_i32 = arith.constant 0 : i32
    %c0_i32_0 = arith.constant 0 : i32
    return %arg0, %c0_i32 : i32, i32
  }
  func.func @transform_1(%arg0: i32) -> (i32, i32) {
    %c0_i32 = arith.constant 0 : i32
    %c0_i32_0 = arith.constant 0 : i32
    return %arg0, %c0_i32 : i32, i32
  }
  func.func @transform_2(%arg0: i32) -> (i32, i32) {
    %c0_i32 = arith.constant 0 : i32
    %c0_i32_0 = arith.constant 0 : i32
    return %arg0, %c0_i32 : i32, i32
  }
}

</mosaic_0001>

<llo_original>
// kernel: _shortcut_pallas.1
$region0: #{_shortcut_pallas.1}
  #allocation0 [shape = 'u32[]', space=smem, size = 0x4, offset = 0x4, fixed_abs, tag = 'smem constant byte address 0x4 - core index']
  #allocation1 [shape = 'u32[144,128]{1,0:T(1,128)}', space=vmem, size = 0x12000, scoped, tag = 'internal scratch']
  %s0 = inlined_call_operand.vmem [shape: f32[8,512], index: 0, kind: input, shape index: {}]
  %s1 = inlined_call_operand.vmem [shape: f32[8,512], index: 1, kind: input, shape index: {}, may-alias: {1,2}]
  %s2 = inlined_call_operand.vmem [shape: f32[8,512], index: 2, kind: output, shape index: {}, may-alias: {1,2}]
  %s3 = sld [smem:[#allocation0]]
  $region18: #{_shortcut_pallas.1} parent=0
    _
  %s5 = ssub.s32 1, %s3
  %s6 = scalar_select 0, %s5, %s3
  // Predicated region
  $region2: #{_shortcut_pallas.1} parent=0 // pred_check
    _
  $region3: #{_shortcut_pallas.1} parent=0 // pred_check_branch
    %8 = sbr.rel (0) target = $region5
  $region4: #{_shortcut_pallas.1} parent=0 // pred_region
    _
  $region5: #{_shortcut_pallas.1} parent=0 // pred_fallthru
    _
  // Predicated region
  $region6: #{_shortcut_pallas.1} parent=0 // pred_check
    _
  $region7: #{_shortcut_pallas.1} parent=0 // pred_check_branch
    %10 = sbr.rel (0) target = $region9
  $region8: #{_shortcut_pallas.1} parent=0 // pred_region
    _
  $region9: #{_shortcut_pallas.1} parent=0 // pred_fallthru
    _
  %v11 = vld [vmem:[%s0] sm:$0xff]
  %v12 = vld [vmem:[%s0 + $0x8] sm:$0xff]
  %v13 = vld [vmem:[%s0 + $0x10] sm:$0xff]
  %v14 = vld [vmem:[%s0 + $0x18] sm:$0xff]
  %v15 = vld [vmem:[%s1] sm:$0xff]
  %v16 = vld [vmem:[%s1 + $0x8] sm:$0xff]
  %v17 = vld [vmem:[%s1 + $0x10] sm:$0xff]
  %v18 = vld [vmem:[%s1 + $0x18] sm:$0xff]
  %v19 = vadd.f32 %v11, %v15
  %v20 = vadd.f32 %v12, %v16
  %v21 = vadd.f32 %v13, %v17
  %v22 = vadd.f32 %v14, %v18
  %23 = vst [vmem:[%s2] sm:$0xff] %v19
  %24 = vst [vmem:[%s2 + $0x8] sm:$0xff] %v20
  %25 = vst [vmem:[%s2 + $0x10] sm:$0xff] %v21
  %26 = vst [vmem:[%s2 + $0x18] sm:$0xff] %v22
  // Predicated region
  $region10: #{_shortcut_pallas.1} parent=0 // pred_check
    _
  $region11: #{_shortcut_pallas.1} parent=0 // pred_check_branch
    %28 = sbr.rel (0) target = $region13
  $region12: #{_shortcut_pallas.1} parent=0 // pred_region
    _
  $region13: #{_shortcut_pallas.1} parent=0 // pred_fallthru
    _
  // Predicated region
  $region14: #{_shortcut_pallas.1} parent=0 // pred_check
    _
  $region15: #{_shortcut_pallas.1} parent=0 // pred_check_branch
    %30 = sbr.rel (0) target = $region17
  $region16: #{_shortcut_pallas.1} parent=0 // pred_region
    _
  $region17: #{_shortcut_pallas.1} parent=0 // pred_fallthru
    _

</llo_original>
